<compile_context>
chip_gen: v7x
topology: tpu7x:2x2x1
jax: 0.10.0
libtpu: 0.0.40
codegen_flags: <defaults>
</compile_context>

<pallas_src>
import math
from functools import partial

import jax
import jax.numpy as jnp
from jax import lax
from jax.experimental import pallas as pl
from jax.experimental.pallas import tpu as pltpu

NEG_SLOPE = 0.01          # F.leaky_relu default negative_slope
_UNROLL_MAX = 8           # statically unroll hidden-layer loop up to this depth


def _leaky_relu(h):
    # maximum(h, a*h) == leaky_relu(h) for 0 < a < 1: one vmul + vmax (no select).
    return jnp.maximum(h, NEG_SLOPE * h)


def _round_up(x, m):
    return (x + m - 1) // m * m


def _mlp_kernel(n_hidden, compute_dtype, x_ref, w_in_ref, b_in_ref, *rest):
    if n_hidden > 0:
        wh_ref, bh_ref, w_out_ref, b_out_ref, o_ref = rest
    else:
        wh_ref = bh_ref = None
        w_out_ref, b_out_ref, o_ref = rest

    cd = compute_dtype

    # First layer: (TB, D) @ (D, H) -> f32 accumulate; bias + activation in f32.
    h = jnp.dot(x_ref[...], w_in_ref[...], preferred_element_type=jnp.float32)
    h = _leaky_relu(h + b_in_ref[...])

    # Hidden layers.
    if n_hidden > 0:
        if n_hidden <= _UNROLL_MAX:
            # Static unroll: static VMEM slices, full scheduler visibility.
            for l in range(n_hidden):
                hh = jnp.dot(h.astype(cd), wh_ref[l],
                             preferred_element_type=jnp.float32)
                h = _leaky_relu(hh + bh_ref[l])
        else:
            # Deep nets: bounded-body loop keeps vreg live ranges flat.
            def body(l, h):
                hh = jnp.dot(h.astype(cd), wh_ref[l],
                             preferred_element_type=jnp.float32)
                return _leaky_relu(hh + bh_ref[l])
            h = lax.fori_loop(0, n_hidden, body, h)

    # Output layer, computed transposed so the store is lane-dense:
    #   (1, H) contracted with (TB, H) over H  ->  (1, TB)
    out = lax.dot_general(
        w_out_ref[...], h.astype(cd),
        dimension_numbers=(((1,), (1,)), ((), ())),
        preferred_element_type=jnp.float32)
    o_ref[...] = (out + b_out_ref[0]).astype(o_ref.dtype)


def mlp_forward(x, params, *, tile_b=512, compute_dtype=jnp.bfloat16,
                interpret=False):
    """x: (B, input_dim) float32 (or (input_dim,)). Returns (B, 1) float32."""
    w_in, b_in, wh, bh, w_out, b_out = params
    if x.ndim == 1:                       # mirrors MLP.input_torchify
        x = x[None, :]
    # TODO(synk): transform_input(x, concept) treated as identity.

    B, D = x.shape
    H = w_in.shape[1]
    n_hidden = wh.shape[0]

    # ---- batch tiling (lane-dense output requires tile_b % 128 == 0 when the
    # grid has more than one step; a single step may use the full padded batch).
    if _round_up(B, 8) <= tile_b:
        tile_b = _round_up(B, 8)
    else:
        tile_b = max(128, _round_up(tile_b, 128))
    B_pad = _round_up(B, tile_b)
    grid = (B_pad // tile_b,)

    # ---- cast matmul operands (halves DMA on bf16); biases stay f32.
    xc = x.astype(compute_dtype)
    if B_pad != B:
        xc = jnp.pad(xc, ((0, B_pad - B), (0, 0)))
    w_in_c = w_in.astype(compute_dtype)                   # (D, H)
    w_out_c = w_out.reshape(1, H).astype(compute_dtype)   # (1, H) row layout
    b_in_f = b_in.astype(jnp.float32)                     # (1, H)
    b_out_s = b_out.reshape((1,)).astype(jnp.float32)     # scalar, lives in SMEM

    in_specs = [
        pl.BlockSpec((tile_b, D), lambda i: (i, 0)),   # x, tiled over batch
        pl.BlockSpec((D, H), lambda i: (0, 0)),        # w_in (grid-invariant)
        pl.BlockSpec((1, H), lambda i: (0, 0)),        # b_in
    ]
    inputs = [xc, w_in_c, b_in_f]
    if n_hidden > 0:                                   # guard zero-extent blocks
        in_specs += [
            pl.BlockSpec((n_hidden, H, H), lambda i: (0, 0, 0)),
            pl.BlockSpec((n_hidden, 1, H), lambda i: (0, 0, 0)),
        ]
        inputs += [wh.astype(compute_dtype), bh.astype(jnp.float32)]
    in_specs += [
        pl.BlockSpec((1, H), lambda i: (0, 0)),        # w_out row
        pl.BlockSpec(memory_space=pltpu.MemorySpace.SMEM),  # b_out scalar
    ]
    inputs += [w_out_c, b_out_s]

    # ---- explicit scoped-VMEM budget (double-buffered tiles + weights + f32
    # activations), ~2x headroom, capped below v7x's 64 MiB physical VMEM.
    csz = jnp.dtype(compute_dtype).itemsize
    lane = lambda n: _round_up(max(n, 1), 128)
    sub = lambda n: _round_up(max(n, 1), 8)
    est = (2 * sub(tile_b) * lane(D) * csz                       # x tiles
           + 2 * sub(1) * lane(tile_b) * 4                       # out tiles
           + 2 * (sub(D) + n_hidden * sub(H) + sub(1)) * lane(H) * csz  # weights
           + (n_hidden + 1) * sub(1) * lane(H) * 4               # biases
           + 6 * sub(tile_b) * lane(H) * 4)                      # f32 activations
    vmem_limit = int(min(max(2 * est, 32 * 1024 * 1024), 56 * 1024 * 1024))

    kernel = partial(_mlp_kernel, n_hidden, compute_dtype)

    out_row = pl.pallas_call(
        kernel,
        out_shape=jax.ShapeDtypeStruct((1, B_pad), jnp.float32),
        grid_spec=pltpu.PrefetchScalarGridSpec(
            num_scalar_prefetch=0,
            grid=grid,
            in_specs=in_specs,
            # lane-dense output: last block dim is tile_b (multiple of 128 when
            # grid > 1), so stores are unmasked vst instead of vst.msk.
            out_specs=pl.BlockSpec((1, tile_b), lambda i: (0, i)),
        ),
        compiler_params=pltpu.CompilerParams(
            dimension_semantics=("parallel",),   # batch axis shards across TCs
            vmem_limit_bytes=vmem_limit),
        interpret=interpret,
    )(*inputs)

    return out_row.reshape(B_pad, 1)[:B]


def init_mlp_params(key, nb_layers, nb_units, input_dim):
    """Mirror the PyTorch init: xavier_normal_ with leaky_relu gain, zero bias."""
    gain = math.sqrt(2.0 / (1.0 + NEG_SLOPE ** 2))  # calculate_gain('leaky_relu')
    dim_list = [input_dim] + [nb_units] * nb_layers + [1]

    keys = jax.random.split(key, len(dim_list) - 1)
    weights, biases = [], []
    for i, k in enumerate(keys):
        fan_in, fan_out = dim_list[i], dim_list[i + 1]
        std = gain * math.sqrt(2.0 / (fan_in + fan_out))
        # stored as (in, out) so the kernel computes y = x @ W + b
        weights.append(std * jax.random.normal(k, (fan_in, fan_out), jnp.float32))
        biases.append(jnp.zeros((1, fan_out), jnp.float32))

    w_in, b_in = weights[0], biases[0]
    w_out, b_out = weights[-1], biases[-1]
    n_hidden = nb_layers - 1
    if n_hidden > 0:
        wh = jnp.stack(weights[1:-1], axis=0)       # (n_hidden, H, H)
        bh = jnp.stack(biases[1:-1], axis=0)        # (n_hidden, 1, H)
    else:
        wh = jnp.zeros((0, nb_units, nb_units), jnp.float32)
        bh = jnp.zeros((0, 1, nb_units), jnp.float32)
    return (w_in, b_in, wh, bh, w_out, b_out)


def mlp_reference(x, params, compute_dtype=jnp.float32):
    """Pure-JAX reference. compute_dtype mimics the kernel's matmul-input cast."""
    w_in, b_in, wh, bh, w_out, b_out = params
    if x.ndim == 1:
        x = x[None, :]
    cd = compute_dtype
    h = jnp.dot(x.astype(cd), w_in.astype(cd),
                preferred_element_type=jnp.float32) + b_in
    h = _leaky_relu(h)
    for l in range(wh.shape[0]):
        h = jnp.dot(h.astype(cd), wh[l].astype(cd),
                    preferred_element_type=jnp.float32) + bh[l]
        h = _leaky_relu(h)
    return jnp.dot(h.astype(cd), w_out.astype(cd),
                   preferred_element_type=jnp.float32) + b_out


if __name__ == "__main__":
    nb_layers, nb_units, input_dim = 2, 32, 16

    key = jax.random.PRNGKey(0)
    k_param, k_x = jax.random.split(key)
    params = init_mlp_params(k_param, nb_layers, nb_units, input_dim)

    # --- multi-tile case: 256 rows with a 128-row tile -> 2 grid steps.
    batch = 256
    x = jax.random.normal(k_x, (batch, input_dim), jnp.float32)
    out = jax.block_until_ready(mlp_forward(x, params, tile_b=128))
    assert out.shape == (batch, 1)

    # Compare against a reference that applies the same bf16 matmul-input cast.
    ref_bf16 = mlp_reference(x, params, compute_dtype=jnp.bfloat16)
    assert jnp.allclose(out, ref_bf16, atol=2e-3, rtol=2e-3), \
        "mismatch vs bf16 reference"

    # Loose sanity check against the full-f32 reference (bf16 rounding error).
    ref_f32 = mlp_reference(x, params)
    assert jnp.allclose(out, ref_f32, atol=1e-1, rtol=1e-1), \
        "mismatch vs f32 reference"

    # --- 1-D input path (mirrors input_torchify's unsqueeze): single grid step.
    x1 = jax.random.normal(jax.random.PRNGKey(1), (input_dim,), jnp.float32)
    out1 = jax.block_until_ready(mlp_forward(x1, params))
    assert out1.shape == (1, 1)
    ref1 = mlp_reference(x1, params, compute_dtype=jnp.bfloat16)
    assert jnp.allclose(out1, ref1, atol=2e-3, rtol=2e-3), "mismatch (1-D input)"

    print("KERNEL_OK")
</pallas_src>

<mosaic_0001>
module attributes {stable_mosaic.version = 11 : i64} {
  func.func @_mlp_kernel(%arg0: i32, %arg1: memref<128x16xbf16, #tpu.memory_space<vmem>>, %arg2: memref<16x32xbf16, #tpu.memory_space<vmem>>, %arg3: memref<1x32xf32, #tpu.memory_space<vmem>>, %arg4: memref<1x32x32xbf16, #tpu.memory_space<vmem>>, %arg5: memref<1x1x32xf32, #tpu.memory_space<vmem>>, %arg6: memref<1x32xbf16, #tpu.memory_space<vmem>>, %arg7: memref<1xf32, #tpu.memory_space<smem>>, %arg8: memref<1x128xf32, #tpu.memory_space<vmem>>) attributes {dimension_semantics = [#tpu.dimension_semantics<parallel>], iteration_bounds = array<i64: 2>, scalar_prefetch = 0 : i64, scratch_operands = 0 : i64, tpu.core_type = #tpu.core_type<tc>, window_params = [{transform_indices = @transform_0, window_bounds = array<i64: 128, 16>}, {pipeline_mode = #tpu.pipeline_mode<synchronous>, transform_indices = @transform_1, window_bounds = array<i64: 16, 32>}, {pipeline_mode = #tpu.pipeline_mode<synchronous>, transform_indices = @transform_2, window_bounds = array<i64: 1, 32>}, {pipeline_mode = #tpu.pipeline_mode<synchronous>, transform_indices = @transform_3, window_bounds = array<i64: 1, 32, 32>}, {pipeline_mode = #tpu.pipeline_mode<synchronous>, transform_indices = @transform_4, window_bounds = array<i64: 1, 1, 32>}, {pipeline_mode = #tpu.pipeline_mode<synchronous>, transform_indices = @transform_5, window_bounds = array<i64: 1, 32>}, {transform_indices = @transform_6, window_bounds = array<i64: 1>}, {transform_indices = @transform_7, window_bounds = array<i64: 1, 128>}]} {
    %c0 = arith.constant 0 : index
    %c0_0 = arith.constant 0 : index
    %0 = vector.load %arg1[%c0, %c0_0] : memref<128x16xbf16, #tpu.memory_space<vmem>>, vector<128x16xbf16>
    %c0_1 = arith.constant 0 : index
    %c0_2 = arith.constant 0 : index
    %1 = vector.load %arg2[%c0_1, %c0_2] : memref<16x32xbf16, #tpu.memory_space<vmem>>, vector<16x32xbf16>
    %cst = arith.constant dense<0.000000e+00> : vector<128x32xf32>
    %2 = tpu.matmul %0, %1, %cst {dimension_numbers = #tpu.dot_dimension_numbers<[1], [0], [0], [1], [0, 0, 1, 1], [], []>} : vector<128x16xbf16>, vector<16x32xbf16>, vector<128x32xf32> -> vector<128x32xf32>
    %c0_3 = arith.constant 0 : index
    %c0_4 = arith.constant 0 : index
    %3 = vector.load %arg3[%c0_3, %c0_4] : memref<1x32xf32, #tpu.memory_space<vmem>>, vector<1x32xf32>
    %4 = vector.broadcast %3 : vector<1x32xf32> to vector<128x32xf32>
    %5 = arith.addf %2, %4 : vector<128x32xf32>
    %cst_5 = arith.constant 0.00999999977 : f32
    %6 = vector.broadcast %cst_5 : f32 to vector<128x32xf32>
    %7 = arith.mulf %6, %5 : vector<128x32xf32>
    %8 = arith.maximumf %5, %7 : vector<128x32xf32>
    %9 = arith.truncf %8 : vector<128x32xf32> to vector<128x32xbf16>
    %c0_6 = arith.constant 0 : index
    %c0_7 = arith.constant 0 : index
    %c0_8 = arith.constant 0 : index
    %10 = vector.load %arg4[%c0_6, %c0_7, %c0_8] : memref<1x32x32xbf16, #tpu.memory_space<vmem>>, vector<1x32x32xbf16>
    %11 = vector.shape_cast %10 : vector<1x32x32xbf16> to vector<32x32xbf16>
    %cst_9 = arith.constant dense<0.000000e+00> : vector<128x32xf32>
    %12 = tpu.matmul %9, %11, %cst_9 {dimension_numbers = #tpu.dot_dimension_numbers<[1], [0], [0], [1], [0, 0, 1, 1], [], []>} : vector<128x32xbf16>, vector<32x32xbf16>, vector<128x32xf32> -> vector<128x32xf32>
    %c0_10 = arith.constant 0 : index
    %c0_11 = arith.constant 0 : index
    %c0_12 = arith.constant 0 : index
    %13 = vector.load %arg5[%c0_10, %c0_11, %c0_12] : memref<1x1x32xf32, #tpu.memory_space<vmem>>, vector<1x1x32xf32>
    %14 = vector.shape_cast %13 : vector<1x1x32xf32> to vector<1x32xf32>
    %15 = vector.broadcast %14 : vector<1x32xf32> to vector<128x32xf32>
    %16 = arith.addf %12, %15 : vector<128x32xf32>
    %cst_13 = arith.constant 0.00999999977 : f32
    %17 = vector.broadcast %cst_13 : f32 to vector<128x32xf32>
    %18 = arith.mulf %17, %16 : vector<128x32xf32>
    %19 = arith.maximumf %16, %18 : vector<128x32xf32>
    %c0_14 = arith.constant 0 : index
    %c0_15 = arith.constant 0 : index
    %20 = vector.load %arg6[%c0_14, %c0_15] : memref<1x32xbf16, #tpu.memory_space<vmem>>, vector<1x32xbf16>
    %21 = arith.truncf %19 : vector<128x32xf32> to vector<128x32xbf16>
    %cst_16 = arith.constant dense<0.000000e+00> : vector<1x128xf32>
    %22 = tpu.matmul %20, %21, %cst_16 {dimension_numbers = #tpu.dot_dimension_numbers<[1], [1], [0], [0], [0, 0, 1, 0], [], []>} : vector<1x32xbf16>, vector<128x32xbf16>, vector<1x128xf32> -> vector<1x128xf32>
    %c0_17 = arith.constant 0 : index
    %23 = memref.load %arg7[%c0_17] : memref<1xf32, #tpu.memory_space<smem>>
    %24 = vector.broadcast %23 : f32 to vector<1x128xf32>
    %25 = arith.addf %22, %24 : vector<1x128xf32>
    %c0_18 = arith.constant 0 : index
    %c0_19 = arith.constant 0 : index
    %26 = vector.load %arg8[%c0_18, %c0_19] : memref<1x128xf32, #tpu.memory_space<vmem>>, vector<1x128xf32>
    tpu.vector_store %arg8[%c0_18, %c0_19], %25 {strides = array<i32>} : memref<1x128xf32, #tpu.memory_space<vmem>>, vector<1x128xf32>,
    return
  }
  func.func @transform_0(%arg0: i32) -> (i32, i32) {
    %c0_i32 = arith.constant 0 : i32
    %c0_i32_0 = arith.constant 0 : i32
    return %arg0, %c0_i32 : i32, i32
  }
  func.func @transform_1(%arg0: i32) -> (i32, i32) {
    %c0_i32 = arith.constant 0 : i32
    %c0_i32_0 = arith.constant 0 : i32
    %c0_i32_1 = arith.constant 0 : i32
    return %c0_i32, %c0_i32_0 : i32, i32
  }
  func.func @transform_2(%arg0: i32) -> (i32, i32) {
    %c0_i32 = arith.constant 0 : i32
    %c0_i32_0 = arith.constant 0 : i32
    %c0_i32_1 = arith.constant 0 : i32
    return %c0_i32, %c0_i32_0 : i32, i32
  }
  func.func @transform_3(%arg0: i32) -> (i32, i32, i32) {
    %c0_i32 = arith.constant 0 : i32
    %c0_i32_0 = arith.constant 0 : i32
    %c0_i32_1 = arith.constant 0 : i32
    %c0_i32_2 = arith.constant 0 : i32
    return %c0_i32, %c0_i32_0, %c0_i32_1 : i32, i32, i32
  }
  func.func @transform_4(%arg0: i32) -> (i32, i32, i32) {
    %c0_i32 = arith.constant 0 : i32
    %c0_i32_0 = arith.constant 0 : i32
    %c0_i32_1 = arith.constant 0 : i32
    %c0_i32_2 = arith.constant 0 : i32
    return %c0_i32, %c0_i32_0, %c0_i32_1 : i32, i32, i32
  }
  func.func @transform_5(%arg0: i32) -> (i32, i32) {
    %c0_i32 = arith.constant 0 : i32
    %c0_i32_0 = arith.constant 0 : i32
    %c0_i32_1 = arith.constant 0 : i32
    return %c0_i32, %c0_i32_0 : i32, i32
  }
  func.func @transform_6(%arg0: i32) -> i32 {
    %c0_i32 = arith.constant 0 : i32
    %c0_i32_0 = arith.constant 0 : i32
    return %c0_i32 : i32
  }
  func.func @transform_7(%arg0: i32) -> (i32, i32) {
    %c0_i32 = arith.constant 0 : i32
    %c0_i32_0 = arith.constant 0 : i32
    return %c0_i32, %arg0 : i32, i32
  }
}

</mosaic_0001>

<llo_original>
// kernel: tpu_custom_call.1
$region0: #{tpu_custom_call.1}
  #allocation0 [shape = 'u32[]', space=smem, size = 0x4, offset = 0x4, fixed_abs, tag = 'smem constant byte address 0x4 - core index']
  #allocation1 [shape = 'u32[144,128]{1,0:T(1,128)}', space=vmem, size = 0x12000, scoped, tag = 'internal scratch']
  #allocation2 [shape = 'f32[1]{0:T(128)S(6)}', space=smem, size = 0x200, scoped, tag = 'scoped memory for tpu_custom_call.1']
  %s0 = inlined_call_operand.vmem [shape: bf16[256,16], index: 0, kind: input, shape index: {}]
  %s1 = inlined_call_operand.vmem [shape: bf16[16,32], index: 1, kind: input, shape index: {}]
  %s2 = inlined_call_operand.vmem [shape: f32[1,32], index: 2, kind: input, shape index: {}]
  %s3 = inlined_call_operand.vmem [shape: bf16[1,32,32], index: 3, kind: input, shape index: {}]
  %s4 = inlined_call_operand.vmem [shape: f32[1,1,32], index: 4, kind: input, shape index: {}]
  %s5 = inlined_call_operand.vmem [shape: bf16[1,32], index: 5, kind: input, shape index: {}]
  %s6 = inlined_call_operand.<no memory space> [shape: f32[1], index: 6, kind: input, shape index: {}]
  %s7 = inlined_call_operand.hbm [shape: f32[1,256], index: 7, kind: output, shape index: {}]
  %s8 = sld [smem:[#allocation0]]
  $region61: #{tpu_custom_call.1} parent=0
    _
  %s10 = ssub.s32 1, %s8
  %s11 = scalar_select 0, %s10, %s8
  %12 = sst [smem:[#allocation2]] %s6
  $region1: #{tpu_custom_call.1} parent=0
    #allocation3 [shape = 'u8[1024]{0}', space=vmem, size = 0x400, scoped, tag = 'output window, operand 0']
    #allocation4 [shape = 's32[2]{0}', space=sflag, size = 0x8, scoped, tag = 'scoped memory for tpu_custom_call.1']
    %13 = vsyncpa [#allocation4], 0
    %s14 = scalar_lea.sflag [#allocation4], 1
    %15 = vsyncpa %s14, 0
    loop: start=0, step=1, limit=4
    $region2: #{tpu_custom_call.1} parent=1 // loop_pre_header
      _
    $region3: #{tpu_custom_call.1} parent=1 // loop_header
      %s17 = sphi 0, %s21
      %p18 = scmp.ge.s32.totalorder %s17, 4
      %s27 = sphi 0, %s29
      %s30 = sphi 0, %s27
      %s31 = sphi 0, %s30
      %s47 = sphi 0, %s31
      %s51 = sphi 0, %s51
      %s53 = sphi 0, %s51
      %s54 = sphi 0, %s53
      %s68 = sphi 0, %s54
      %s72 = sphi 0, %s72
      %s74 = sphi 0, %s72
      %s75 = sphi 0, %s74
      %s89 = sphi 0, %s75
      %s93 = sphi 0, %s93
      %s95 = sphi 0, %s93
      %s96 = sphi 0, %s95
      %s110 = sphi 0, %s96
      %s114 = sphi 0, %s114
      %s116 = sphi 0, %s114
      %s117 = sphi 0, %s116
      %s131 = sphi 0, %s117
      %s135 = sphi 0, %s135
      %s137 = sphi 0, %s135
      %s138 = sphi 0, %s137
      %s152 = sphi 0, %s138
      %s156 = sphi 0, %s156
      %s158 = sphi 0, %s156
      %s159 = sphi 0, %s158
      %s173 = sphi 0, %s159
      %s179 = sphi 0, %s181
      %s182 = sphi 0, %s179
      %s183 = sphi 0, %s182
      %s199 = sphi 0, %s183
    $region4: #{tpu_custom_call.1} parent=1 // loop_header_branch
      %20 = sbr.rel (%p18) target = $region8
    $region5: #{tpu_custom_call.1} parent=1 // loop_body
      %s22 = ssub.s32 %s17, 1
      %s23 = ssub.s32 %s17, 2
      %s24 = sadd.s32 %s17, 1
      %s25 = ssub.s32 %s17, %s24
      %p26 = scmp.eq.s32.totalorder %s25, 0
      %s28 = sadd.s32 %s27, 1
      %s29 = scalar_select %p26, %s27, %s28
      %p32 = pneg %p26
      %p33 = scmp.eq.s32.totalorder %s17, 1
      %p34 = por %p32, %p33
      %p35 = scmp.ne.s32.totalorder %s27, %s30
      %p36 = scmp.eq.s32.totalorder %s17, 0
      %p37 = por %p35, %p36
      %p38 = scmp.ne.s32.totalorder %s27, %s30
      %p39 = scmp.eq.s32.totalorder %s22, 1
      %p40 = por %p38, %p39
      %p41 = scmp.ne.s32.totalorder %s30, %s31
      %p42 = scmp.eq.s32.totalorder %s22, 0
      %p43 = por %p41, %p42
      %p44 = scmp.ne.s32.totalorder %s30, %s31
      %p45 = scmp.eq.s32.totalorder %s23, 1
      %p46 = por %p44, %p45
      %p48 = scmp.ne.s32.totalorder %s31, %s47
      %p49 = scmp.eq.s32.totalorder %s23, 0
      %p50 = por %p48, %p49
      %s52 = sadd.s32 %s51, 1
      %p55 = scmp.eq.s32.totalorder %s17, 1
      %p56 = scmp.ne.s32.totalorder %s51, %s53
      %p57 = scmp.eq.s32.totalorder %s17, 0
      %p58 = por %p56, %p57
      %p59 = scmp.ne.s32.totalorder %s51, %s53
      %p60 = scmp.eq.s32.totalorder %s22, 1
      %p61 = por %p59, %p60
      %p62 = scmp.ne.s32.totalorder %s53, %s54
      %p63 = scmp.eq.s32.totalorder %s22, 0
      %p64 = por %p62, %p63
      %p65 = scmp.ne.s32.totalorder %s53, %s54
      %p66 = scmp.eq.s32.totalorder %s23, 1
      %p67 = por %p65, %p66
      %p69 = scmp.ne.s32.totalorder %s54, %s68
      %p70 = scmp.eq.s32.totalorder %s23, 0
      %p71 = por %p69, %p70
      %s73 = sadd.s32 %s72, 1
      %p76 = scmp.eq.s32.totalorder %s17, 1
      %p77 = scmp.ne.s32.totalorder %s72, %s74
      %p78 = scmp.eq.s32.totalorder %s17, 0
      %p79 = por %p77, %p78
      %p80 = scmp.ne.s32.totalorder %s72, %s74
      %p81 = scmp.eq.s32.totalorder %s22, 1
      %p82 = por %p80, %p81
      %p83 = scmp.ne.s32.totalorder %s74, %s75
      %p84 = scmp.eq.s32.totalorder %s22, 0
      %p85 = por %p83, %p84
      %p86 = scmp.ne.s32.totalorder %s74, %s75
      %p87 = scmp.eq.s32.totalorder %s23, 1
      %p88 = por %p86, %p87
      %p90 = scmp.ne.s32.totalorder %s75, %s89
      %p91 = scmp.eq.s32.totalorder %s23, 0
      %p92 = por %p90, %p91
      %s94 = sadd.s32 %s93, 1
      %p97 = scmp.eq.s32.totalorder %s17, 1
      %p98 = scmp.ne.s32.totalorder %s93, %s95
      %p99 = scmp.eq.s32.totalorder %s17, 0
      %p100 = por %p98, %p99
      %p101 = scmp.ne.s32.totalorder %s93, %s95
      %p102 = scmp.eq.s32.totalorder %s22, 1
      %p103 = por %p101, %p102
      %p104 = scmp.ne.s32.totalorder %s95, %s96
      %p105 = scmp.eq.s32.totalorder %s22, 0
      %p106 = por %p104, %p105
      %p107 = scmp.ne.s32.totalorder %s95, %s96
      %p108 = scmp.eq.s32.totalorder %s23, 1
      %p109 = por %p107, %p108
      %p111 = scmp.ne.s32.totalorder %s96, %s110
      %p112 = scmp.eq.s32.totalorder %s23, 0
      %p113 = por %p111, %p112
      %s115 = sadd.s32 %s114, 1
      %p118 = scmp.eq.s32.totalorder %s17, 1
      %p119 = scmp.ne.s32.totalorder %s114, %s116
      %p120 = scmp.eq.s32.totalorder %s17, 0
      %p121 = por %p119, %p120
      %p122 = scmp.ne.s32.totalorder %s114, %s116
      %p123 = scmp.eq.s32.totalorder %s22, 1
      %p124 = por %p122, %p123
      %p125 = scmp.ne.s32.totalorder %s116, %s117
      %p126 = scmp.eq.s32.totalorder %s22, 0
      %p127 = por %p125, %p126
      %p128 = scmp.ne.s32.totalorder %s116, %s117
      %p129 = scmp.eq.s32.totalorder %s23, 1
      %p130 = por %p128, %p129
      %p132 = scmp.ne.s32.totalorder %s117, %s131
      %p133 = scmp.eq.s32.totalorder %s23, 0
      %p134 = por %p132, %p133
      %s136 = sadd.s32 %s135, 1
      %p139 = scmp.eq.s32.totalorder %s17, 1
      %p140 = scmp.ne.s32.totalorder %s135, %s137
      %p141 = scmp.eq.s32.totalorder %s17, 0
      %p142 = por %p140, %p141
      %p143 = scmp.ne.s32.totalorder %s135, %s137
      %p144 = scmp.eq.s32.totalorder %s22, 1
      %p145 = por %p143, %p144
      %p146 = scmp.ne.s32.totalorder %s137, %s138
      %p147 = scmp.eq.s32.totalorder %s22, 0
      %p148 = por %p146, %p147
      %p149 = scmp.ne.s32.totalorder %s137, %s138
      %p150 = scmp.eq.s32.totalorder %s23, 1
      %p151 = por %p149, %p150
      %p153 = scmp.ne.s32.totalorder %s138, %s152
      %p154 = scmp.eq.s32.totalorder %s23, 0
      %p155 = por %p153, %p154
      %s157 = sadd.s32 %s156, 1
      %p160 = scmp.eq.s32.totalorder %s17, 1
      %p161 = scmp.ne.s32.totalorder %s156, %s158
      %p162 = scmp.eq.s32.totalorder %s17, 0
      %p163 = por %p161, %p162
      %p164 = scmp.ne.s32.totalorder %s156, %s158
      %p165 = scmp.eq.s32.totalorder %s22, 1
      %p166 = por %p164, %p165
      %p167 = scmp.ne.s32.totalorder %s158, %s159
      %p168 = scmp.eq.s32.totalorder %s22, 0
      %p169 = por %p167, %p168
      %p170 = scmp.ne.s32.totalorder %s158, %s159
      %p171 = scmp.eq.s32.totalorder %s23, 1
      %p172 = por %p170, %p171
      %p174 = scmp.ne.s32.totalorder %s159, %s173
      %p175 = scmp.eq.s32.totalorder %s23, 0
      %p176 = por %p174, %p175
      %s177 = ssub.s32 %s17, %s24
      %p178 = scmp.eq.s32.totalorder %s177, 0
      %s180 = sadd.s32 %s179, 1
      %s181 = scalar_select %p178, %s179, %s180
      %p184 = pneg %p178
      %p185 = scmp.eq.s32.totalorder %s17, 1
      %p186 = por %p184, %p185
      %p187 = scmp.ne.s32.totalorder %s179, %s182
      %p188 = scmp.eq.s32.totalorder %s17, 0
      %p189 = por %p187, %p188
      %p190 = scmp.ne.s32.totalorder %s179, %s182
      %p191 = scmp.eq.s32.totalorder %s22, 1
      %p192 = por %p190, %p191
      %p193 = scmp.ne.s32.totalorder %s182, %s183
      %p194 = scmp.eq.s32.totalorder %s22, 0
      %p195 = por %p193, %p194
      %p196 = scmp.ne.s32.totalorder %s182, %s183
      %p197 = scmp.eq.s32.totalorder %s23, 1
      %p198 = por %p196, %p197
      %p200 = scmp.ne.s32.totalorder %s183, %s199
      %p201 = scmp.eq.s32.totalorder %s23, 0
      %p202 = por %p200, %p201
      %p203 = scmp.le.s32.totalorder 1, %s17
      %p204 = scmp.lt.s32.totalorder %s17, 3
      %p205 = pnand %p203, %p204
      %p206 = pneg %p205
      // Predicated region
      $region9: #{tpu_custom_call.1} parent=5 // pred_check
        _
      $region10: #{tpu_custom_call.1} parent=5 // pred_check_branch
        %208 = sbr.rel (%p205) target = $region12
      $region11: #{tpu_custom_call.1} parent=5 // pred_region
        %s209 = ssub.s32 %s17, 1
        // Predicated region
        $region13: #{tpu_custom_call.1} parent=11 // pred_check
          %p210 = pneg %p64
        $region14: #{tpu_custom_call.1} parent=11 // pred_check_branch
          %212 = sbr.rel (%p210) target = $region16
        $region15: #{tpu_custom_call.1} parent=11 // pred_region
          _
        $region16: #{tpu_custom_call.1} parent=11 // pred_fallthru
          _
        // Predicated region
        $region17: #{tpu_custom_call.1} parent=11 // pred_check
          %p213 = pneg %p85
        $region18: #{tpu_custom_call.1} parent=11 // pred_check_branch
          %215 = sbr.rel (%p213) target = $region20
        $region19: #{tpu_custom_call.1} parent=11 // pred_region
          _
        $region20: #{tpu_custom_call.1} parent=11 // pred_fallthru
          _
        // Predicated region
        $region21: #{tpu_custom_call.1} parent=11 // pred_check
          %p216 = pneg %p106
        $region22: #{tpu_custom_call.1} parent=11 // pred_check_branch
          %218 = sbr.rel (%p216) target = $region24
        $region23: #{tpu_custom_call.1} parent=11 // pred_region
          _
        $region24: #{tpu_custom_call.1} parent=11 // pred_fallthru
          _
        // Predicated region
        $region25: #{tpu_custom_call.1} parent=11 // pred_check
          %p219 = pneg %p127
        $region26: #{tpu_custom_call.1} parent=11 // pred_check_branch
          %221 = sbr.rel (%p219) target = $region28
        $region27: #{tpu_custom_call.1} parent=11 // pred_region
          _
        $region28: #{tpu_custom_call.1} parent=11 // pred_fallthru
          _
        // Predicated region
        $region29: #{tpu_custom_call.1} parent=11 // pred_check
          %p222 = pneg %p148
        $region30: #{tpu_custom_call.1} parent=11 // pred_check_branch
          %224 = sbr.rel (%p222) target = $region32
        $region31: #{tpu_custom_call.1} parent=11 // pred_region
          _
        $region32: #{tpu_custom_call.1} parent=11 // pred_fallthru
          _
        // Predicated region
        $region33: #{tpu_custom_call.1} parent=11 // pred_check
          %p225 = pneg %p169
        $region34: #{tpu_custom_call.1} parent=11 // pred_check_branch
          %227 = sbr.rel (%p225) target = $region36
        $region35: #{tpu_custom_call.1} parent=11 // pred_region
          _
        $region36: #{tpu_custom_call.1} parent=11 // pred_fallthru
          _
      $region12: #{tpu_custom_call.1} parent=5 // pred_fallthru
        _
      %p228 = scmp.lt.s32.totalorder %s17, 2
      // Predicated region
      $region37: #{tpu_custom_call.1} parent=5 // pred_check
        %p229 = pneg %p228
      $region38: #{tpu_custom_call.1} parent=5 // pred_check_branch
        %231 = sbr.rel (%p229) target = $region40
      $region39: #{tpu_custom_call.1} parent=5 // pred_region
        // Predicated region
        $region41: #{tpu_custom_call.1} parent=39 // pred_check
          %p232 = pneg %p37
        $region42: #{tpu_custom_call.1} parent=39 // pred_check_branch
          %234 = sbr.rel (%p232) target = $region44
        $region43: #{tpu_custom_call.1} parent=39 // pred_region
          %s235 = smul.u32 16, %s17
          %p236 = scmp.lt.s32.totalorder %s235, 31
          %s237 = scalar_select %p236, %s235, 31
          %s238 = smul.addr %s237, 4
          %s239 = scalar_lea.vmem %s0, %s238
          %s240 = smul.u32 16, %s17
        $region44: #{tpu_custom_call.1} parent=39 // pred_fallthru
          _
      $region40: #{tpu_custom_call.1} parent=5 // pred_fallthru
        _
      %p241 = scmp.le.s32.totalorder 1, %s17
      %p242 = scmp.lt.s32.totalorder %s17, 3
      %p243 = pnand %p241, %p242
      %p244 = pneg %p243
      // Predicated region
      $region45: #{tpu_custom_call.1} parent=5 // pred_check
        _
      $region46: #{tpu_custom_call.1} parent=5 // pred_check_branch
        %246 = sbr.rel (%p243) target = $region48
      $region47: #{tpu_custom_call.1} parent=5 // pred_region
        %s247 = ssub.s32 %s17, 1
        %s248 = smul.u32 16, %s22
        %p249 = scmp.lt.s32.totalorder %s248, 31
        %s250 = scalar_select %p249, %s248, 31
        %s251 = smul.addr %s250, 4
        %s252 = scalar_lea.vmem %s0, %s251
        %p253 = pneg %p43
        %p254 = pneg %p40
        %p255 = pneg %p64
        %p256 = pneg %p61
        %p257 = pneg %p85
        %p258 = pneg %p82
        %p259 = pneg %p106
        %p260 = pneg %p103
        %p261 = pneg %p127
        %p262 = pneg %p124
        %p263 = pneg %p148
        %p264 = pneg %p145
        %p265 = pneg %p169
        %p266 = pneg %p166
        %p267 = pneg %p195
        %p268 = pneg %p192
        %s269 = sand.u32 %s182, 1
        %s270 = scalar_lea.sflag [#allocation4], %s269
        %s271 = sand.u32 %s182, 1
        %s272 = scalar_lea.vmem [#allocation3], %s271
        %s273 = smul.u32 16, %s22
        %p274 = scmp.lt.s32.totalorder %s273, 31
        %s275 = scalar_select %p274, %s273, 31
        %s276 = smul.addr %s275, 4
        %s277 = scalar_lea.vmem %s0, %s276
        %s278 = smul.u32 16, %s22
        %v280 = vld [vmem:[%s277] sm:$0xf]
        %v281 = vld [vmem:[%s277 + $0x4] sm:$0xf]
        %v282 = vld [vmem:[%s277 + $0x8] sm:$0xf]
        %v283 = vld [vmem:[%s277 + $0xc] sm:$0xf]
        %v284 = vld [vmem:[%s277 + $0x10] sm:$0xf]
        %v285 = vld [vmem:[%s277 + $0x14] sm:$0xf]
        %v286 = vld [vmem:[%s277 + $0x18] sm:$0xf]
        %v287 = vld [vmem:[%s277 + $0x1c] sm:$0xf]
        %v288 = vld [vmem:[%s277 + $0x20] sm:$0xf]
        %v289 = vld [vmem:[%s277 + $0x24] sm:$0xf]
        %v290 = vld [vmem:[%s277 + $0x28] sm:$0xf]
        %v291 = vld [vmem:[%s277 + $0x2c] sm:$0xf]
        %v292 = vld [vmem:[%s277 + $0x30] sm:$0xf]
        %v293 = vld [vmem:[%s277 + $0x34] sm:$0xf]
        %v294 = vld [vmem:[%s277 + $0x38] sm:$0xf]
        %v295 = vld [vmem:[%s277 + $0x3c] sm:$0xf]
        %v296 = vld [vmem:[%s1] sm:$0xf]
        %v297 = vld [vmem:[%s1 + $0x4] sm:$0xf]
        %v298 = vld [vmem:[%s2] sm:$0x1]
        %v300 = vlaneseq
        %v301 = vshrl.u32 %v300, 7
        %v302 = vsub.s32 0, %v301
        %v303 = vrot.slane %v298, %v302
        %v321 = vunpack.c.l.b16 %v280
        %v322 = vunpack.c.l.b16 %v281
        %v323 = vunpack.c.l.b16 %v282
        %v324 = vunpack.c.l.b16 %v283
        %v325 = vunpack.c.l.b16 %v284
        %v326 = vunpack.c.l.b16 %v285
        %v327 = vunpack.c.l.b16 %v286
        %v328 = vunpack.c.l.b16 %v287
        %v329 = vunpack.c.l.b16 %v288
        %v330 = vunpack.c.l.b16 %v289
        %v331 = vunpack.c.l.b16 %v290
        %v332 = vunpack.c.l.b16 %v291
        %v333 = vunpack.c.l.b16 %v292
        %v334 = vunpack.c.l.b16 %v293
        %v335 = vunpack.c.l.b16 %v294
        %v336 = vunpack.c.l.b16 %v295
        %v337 = vpack.c.b16 %v322, %v321
        %v338 = vpack.c.b16 %v324, %v323
        %v339 = vpack.c.b16 %v326, %v325
        %v340 = vpack.c.b16 %v328, %v327
        %v341 = vpack.c.b16 %v330, %v329
        %v342 = vpack.c.b16 %v332, %v331
        %v343 = vpack.c.b16 %v334, %v333
        %v344 = vpack.c.b16 %v336, %v335
        %v347 = vunpack.c.l.b16 %v296
        %v348 = vunpack.c.l.b16 %v297
        %v349 = vpack.c.b16 %v348, %v347
        %vm351 = vcmask 130048
        %v353 = vsel %vm351, %v337, 0
        %v356 = vsel %vm351, %v338, 0
        %v359 = vsel %vm351, %v339, 0
        %v362 = vsel %vm351, %v340, 0
        %v365 = vsel %vm351, %v341, 0
        %v368 = vsel %vm351, %v342, 0
        %v371 = vsel %vm351, %v343, 0
        %v374 = vsel %vm351, %v344, 0
        %376 = vmatprep.subr.bf16.mxu0 0
        %377 = vmatpush1.bf16.msra.mxu0 %v349
        %378 = vmatprep.subr.bf16.mxu0 0
        %379 = vmatpush1.bf16.msra.mxu0 0
        %380 = vmatprep.subr.bf16.mxu0 0
        %381 = vmatpush1.bf16.msra.mxu0 0
        %382 = vmatprep.subr.bf16.mxu0 0
        %383 = vmatpush1.bf16.msra.mxu0 0
        %384 = vmatprep.subr.bf16.mxu0 0
        %385 = vmatpush1.bf16.msra.mxu0 0
        %386 = vmatprep.subr.bf16.mxu0 0
        %387 = vmatpush1.bf16.msra.mxu0 0
        %388 = vmatprep.subr.bf16.mxu0 0
        %389 = vmatpush1.bf16.msra.mxu0 0
        %390 = vmatprep.subr.bf16.mxu0 0
        %391 = vmatpush1.bf16.msra.mxu0 0
        %392 = vmatprep.subr.bf16.mxu0 0
        %393 = vmatpush1.bf16.msra.mxu0 0
        %394 = vmatprep.subr.bf16.mxu0 0
        %395 = vmatpush1.bf16.msra.mxu0 0
        %396 = vmatprep.subr.bf16.mxu0 0
        %397 = vmatpush1.bf16.msra.mxu0 0
        %398 = vmatprep.subr.bf16.mxu0 0
        %399 = vmatpush1.bf16.msra.mxu0 0
        %400 = vmatprep.subr.bf16.mxu0 0
        %401 = vmatpush1.bf16.msra.mxu0 0
        %402 = vmatprep.subr.bf16.mxu0 0
        %403 = vmatpush1.bf16.msra.mxu0 0
        %404 = vmatprep.subr.bf16.mxu0 0
        %405 = vmatpush1.bf16.msra.mxu0 0
        %406 = vmatprep.subr.bf16.mxu0 0
        %407 = vmatpush1.bf16.msra.mxu0 0
        %408 = vmatprep.mubr.bf16.mxu0 0
        %409 = vmatmul.mubr.bf16.gmra.mrb[0].mxu0 %v353
        %v410 = vpop.f32.mrb[0].mxu0
        %v411 = vadd.f32 %v303, %v410
        %v412 = vpop.f32.mrb[0].mxu0
        %v413 = vpop.f32.mrb[0].mxu0
        %v414 = vadd.f32 %v303, %v413
        %v415 = vpop.f32.mrb[0].mxu0
        %416 = vmatprep.mubr.bf16.mxu0 0
        %417 = vmatmul.mubr.bf16.gmra.mrb[0].mxu0 %v356
        %v418 = vpop.f32.mrb[0].mxu0
        %v419 = vadd.f32 %v303, %v418
        %v420 = vpop.f32.mrb[0].mxu0
        %v421 = vpop.f32.mrb[0].mxu0
        %v422 = vadd.f32 %v303, %v421
        %v423 = vpop.f32.mrb[0].mxu0
        %424 = vmatprep.mubr.bf16.mxu0 0
        %425 = vmatmul.mubr.bf16.gmra.mrb[0].mxu0 %v359
        %v426 = vpop.f32.mrb[0].mxu0
        %v427 = vadd.f32 %v303, %v426
        %v428 = vpop.f32.mrb[0].mxu0
        %v429 = vpop.f32.mrb[0].mxu0
        %v430 = vadd.f32 %v303, %v429
        %v431 = vpop.f32.mrb[0].mxu0
        %432 = vmatprep.mubr.bf16.mxu0 0
        %433 = vmatmul.mubr.bf16.gmra.mrb[0].mxu0 %v362
        %v434 = vpop.f32.mrb[0].mxu0
        %v435 = vadd.f32 %v303, %v434
        %v436 = vpop.f32.mrb[0].mxu0
        %v437 = vpop.f32.mrb[0].mxu0
        %v438 = vadd.f32 %v303, %v437
        %v439 = vpop.f32.mrb[0].mxu0
        %440 = vmatprep.mubr.bf16.mxu0 0
        %441 = vmatmul.mubr.bf16.gmra.mrb[0].mxu0 %v365
        %v442 = vpop.f32.mrb[0].mxu0
        %v443 = vadd.f32 %v303, %v442
        %v444 = vpop.f32.mrb[0].mxu0
        %v445 = vpop.f32.mrb[0].mxu0
        %v446 = vadd.f32 %v303, %v445
        %v447 = vpop.f32.mrb[0].mxu0
        %448 = vmatprep.mubr.bf16.mxu0 0
        %449 = vmatmul.mubr.bf16.gmra.mrb[0].mxu0 %v368
        %v450 = vpop.f32.mrb[0].mxu0
        %v451 = vadd.f32 %v303, %v450
        %v452 = vpop.f32.mrb[0].mxu0
        %v453 = vpop.f32.mrb[0].mxu0
        %v454 = vadd.f32 %v303, %v453
        %v455 = vpop.f32.mrb[0].mxu0
        %456 = vmatprep.mubr.bf16.mxu0 0
        %457 = vmatmul.mubr.bf16.gmra.mrb[0].mxu0 %v371
        %v458 = vpop.f32.mrb[0].mxu0
        %v459 = vadd.f32 %v303, %v458
        %v460 = vpop.f32.mrb[0].mxu0
        %v461 = vpop.f32.mrb[0].mxu0
        %v462 = vadd.f32 %v303, %v461
        %v463 = vpop.f32.mrb[0].mxu0
        %464 = vmatprep.mubr.bf16.mxu0 0
        %465 = vmatmul.mubr.bf16.gmra.mrb[0].mxu0 %v374
        %v466 = vpop.f32.mrb[0].mxu0
        %v467 = vadd.f32 %v303, %v466
        %v468 = vpop.f32.mrb[0].mxu0
        %v469 = vpop.f32.mrb[0].mxu0
        %v470 = vadd.f32 %v303, %v469
        %v471 = vpop.f32.mrb[0].mxu0
        %472 = vdwg.mxu0
        %v473 = vmul.f32 %v411, 0.01
        %v474 = vmul.f32 %v414, 0.01
        %v475 = vmul.f32 %v419, 0.01
        %v476 = vmul.f32 %v422, 0.01
        %v477 = vmul.f32 %v427, 0.01
        %v478 = vmul.f32 %v430, 0.01
        %v479 = vmul.f32 %v435, 0.01
        %v480 = vmul.f32 %v438, 0.01
        %v481 = vmul.f32 %v443, 0.01
        %v482 = vmul.f32 %v446, 0.01
        %v483 = vmul.f32 %v451, 0.01
        %v484 = vmul.f32 %v454, 0.01
        %v485 = vmul.f32 %v459, 0.01
        %v486 = vmul.f32 %v462, 0.01
        %v487 = vmul.f32 %v467, 0.01
        %v488 = vmul.f32 %v470, 0.01
        %v489 = vmax.f32 %v411, %v473
        %v490 = vmax.f32 %v414, %v474
        %v491 = vmax.f32 %v419, %v475
        %v492 = vmax.f32 %v422, %v476
        %v493 = vmax.f32 %v427, %v477
        %v494 = vmax.f32 %v430, %v478
        %v495 = vmax.f32 %v435, %v479
        %v496 = vmax.f32 %v438, %v480
        %v497 = vmax.f32 %v443, %v481
        %v498 = vmax.f32 %v446, %v482
        %v499 = vmax.f32 %v451, %v483
        %v500 = vmax.f32 %v454, %v484
        %v501 = vmax.f32 %v459, %v485
        %v502 = vmax.f32 %v462, %v486
        %v503 = vmax.f32 %v467, %v487
        %v504 = vmax.f32 %v470, %v488
        %v505 = vpack.c.bf16 %v490, %v489
        %v506 = vpack.c.bf16 %v492, %v491
        %v507 = vpack.c.bf16 %v494, %v493
        %v508 = vpack.c.bf16 %v496, %v495
        %v509 = vpack.c.bf16 %v498, %v497
        %v510 = vpack.c.bf16 %v500, %v499
        %v511 = vpack.c.bf16 %v502, %v501
        %v512 = vpack.c.bf16 %v504, %v503
        %v513 = vld [vmem:[%s3] sm:$0xf]
        %v514 = vld [vmem:[%s3 + $0x4] sm:$0xf]
        %v515 = vld [vmem:[%s3 + $0x8] sm:$0xf]
        %v516 = vld [vmem:[%s3 + $0xc] sm:$0xf]
        %v517 = vld [vmem:[%s4] sm:$0x1]
        %v519 = vlaneseq
        %v520 = vshrl.u32 %v519, 7
        %v521 = vsub.s32 0, %v520
        %v522 = vrot.slane %v517, %v521
        %v528 = vunpack.c.l.b16 %v513
        %v529 = vunpack.c.l.b16 %v514
        %v530 = vunpack.c.l.b16 %v515
        %v531 = vunpack.c.l.b16 %v516
        %v532 = vpack.c.b16 %v529, %v528
        %v533 = vpack.c.b16 %v531, %v530
        %vm536 = vcmask 261120
        %v538 = vsel %vm536, %v505, 0
        %v541 = vsel %vm536, %v506, 0
        %v544 = vsel %vm536, %v507, 0
        %v547 = vsel %vm536, %v508, 0
        %v550 = vsel %vm536, %v509, 0
        %v553 = vsel %vm536, %v510, 0
        %v556 = vsel %vm536, %v511, 0
        %v559 = vsel %vm536, %v512, 0
        %561 = vmatprep.subr.bf16.mxu0 0
        %562 = vmatpush1.bf16.msra.mxu0 %v532
        %563 = vmatprep.subr.bf16.mxu0 0
        %564 = vmatpush1.bf16.msra.mxu0 %v533
        %565 = vmatprep.subr.bf16.mxu0 0
        %566 = vmatpush1.bf16.msra.mxu0 0
        %567 = vmatprep.subr.bf16.mxu0 0
        %568 = vmatpush1.bf16.msra.mxu0 0
        %569 = vmatprep.subr.bf16.mxu0 0
        %570 = vmatpush1.bf16.msra.mxu0 0
        %571 = vmatprep.subr.bf16.mxu0 0
        %572 = vmatpush1.bf16.msra.mxu0 0
        %573 = vmatprep.subr.bf16.mxu0 0
        %574 = vmatpush1.bf16.msra.mxu0 0
        %575 = vmatprep.subr.bf16.mxu0 0
        %576 = vmatpush1.bf16.msra.mxu0 0
        %577 = vmatprep.subr.bf16.mxu0 0
        %578 = vmatpush1.bf16.msra.mxu0 0
        %579 = vmatprep.subr.bf16.mxu0 0
        %580 = vmatpush1.bf16.msra.mxu0 0
        %581 = vmatprep.subr.bf16.mxu0 0
        %582 = vmatpush1.bf16.msra.mxu0 0
        %583 = vmatprep.subr.bf16.mxu0 0
        %584 = vmatpush1.bf16.msra.mxu0 0
        %585 = vmatprep.subr.bf16.mxu0 0
        %586 = vmatpush1.bf16.msra.mxu0 0
        %587 = vmatprep.subr.bf16.mxu0 0
        %588 = vmatpush1.bf16.msra.mxu0 0
        %589 = vmatprep.subr.bf16.mxu0 0
        %590 = vmatpush1.bf16.msra.mxu0 0
        %591 = vmatprep.subr.bf16.mxu0 0
        %592 = vmatpush1.bf16.msra.mxu0 0
        %593 = vmatprep.mubr.bf16.mxu0 0
        %594 = vmatmul.mubr.bf16.gmra.mrb[0].mxu0 %v538
        %v595 = vpop.f32.mrb[0].mxu0
        %v596 = vadd.f32 %v522, %v595
        %v597 = vpop.f32.mrb[0].mxu0
        %v598 = vpop.f32.mrb[0].mxu0
        %v599 = vadd.f32 %v522, %v598
        %v600 = vpop.f32.mrb[0].mxu0
        %601 = vmatprep.mubr.bf16.mxu0 0
        %602 = vmatmul.mubr.bf16.gmra.mrb[0].mxu0 %v541
        %v603 = vpop.f32.mrb[0].mxu0
        %v604 = vadd.f32 %v522, %v603
        %v605 = vpop.f32.mrb[0].mxu0
        %v606 = vpop.f32.mrb[0].mxu0
        %v607 = vadd.f32 %v522, %v606
        %v608 = vpop.f32.mrb[0].mxu0
        %609 = vmatprep.mubr.bf16.mxu0 0
        %610 = vmatmul.mubr.bf16.gmra.mrb[0].mxu0 %v544
        %v611 = vpop.f32.mrb[0].mxu0
        %v612 = vadd.f32 %v522, %v611
        %v613 = vpop.f32.mrb[0].mxu0
        %v614 = vpop.f32.mrb[0].mxu0
        %v615 = vadd.f32 %v522, %v614
        %v616 = vpop.f32.mrb[0].mxu0
        %617 = vmatprep.mubr.bf16.mxu0 0
        %618 = vmatmul.mubr.bf16.gmra.mrb[0].mxu0 %v547
        %v619 = vpop.f32.mrb[0].mxu0
        %v620 = vadd.f32 %v522, %v619
        %v621 = vpop.f32.mrb[0].mxu0
        %v622 = vpop.f32.mrb[0].mxu0
        %v623 = vadd.f32 %v522, %v622
        %v624 = vpop.f32.mrb[0].mxu0
        %625 = vmatprep.mubr.bf16.mxu0 0
        %626 = vmatmul.mubr.bf16.gmra.mrb[0].mxu0 %v550
        %v627 = vpop.f32.mrb[0].mxu0
        %v628 = vadd.f32 %v522, %v627
        %v629 = vpop.f32.mrb[0].mxu0
        %v630 = vpop.f32.mrb[0].mxu0
        %v631 = vadd.f32 %v522, %v630
        %v632 = vpop.f32.mrb[0].mxu0
        %633 = vmatprep.mubr.bf16.mxu0 0
        %634 = vmatmul.mubr.bf16.gmra.mrb[0].mxu0 %v553
        %v635 = vpop.f32.mrb[0].mxu0
        %v636 = vadd.f32 %v522, %v635
        %v637 = vpop.f32.mrb[0].mxu0
        %v638 = vpop.f32.mrb[0].mxu0
        %v639 = vadd.f32 %v522, %v638
        %v640 = vpop.f32.mrb[0].mxu0
        %641 = vmatprep.mubr.bf16.mxu0 0
        %642 = vmatmul.mubr.bf16.gmra.mrb[0].mxu0 %v556
        %v643 = vpop.f32.mrb[0].mxu0
        %v644 = vadd.f32 %v522, %v643
        %v645 = vpop.f32.mrb[0].mxu0
        %v646 = vpop.f32.mrb[0].mxu0
        %v647 = vadd.f32 %v522, %v646
        %v648 = vpop.f32.mrb[0].mxu0
        %649 = vmatprep.mubr.bf16.mxu0 0
        %650 = vmatmul.mubr.bf16.gmra.mrb[0].mxu0 %v559
        %v651 = vpop.f32.mrb[0].mxu0
        %v652 = vadd.f32 %v522, %v651
        %v653 = vpop.f32.mrb[0].mxu0
        %v654 = vpop.f32.mrb[0].mxu0
        %v655 = vadd.f32 %v522, %v654
        %v656 = vpop.f32.mrb[0].mxu0
        %657 = vdwg.mxu0
        %v658 = vmul.f32 %v596, 0.01
        %v659 = vmul.f32 %v599, 0.01
        %v660 = vmul.f32 %v604, 0.01
        %v661 = vmul.f32 %v607, 0.01
        %v662 = vmul.f32 %v612, 0.01
        %v663 = vmul.f32 %v615, 0.01
        %v664 = vmul.f32 %v620, 0.01
        %v665 = vmul.f32 %v623, 0.01
        %v666 = vmul.f32 %v628, 0.01
        %v667 = vmul.f32 %v631, 0.01
        %v668 = vmul.f32 %v636, 0.01
        %v669 = vmul.f32 %v639, 0.01
        %v670 = vmul.f32 %v644, 0.01
        %v671 = vmul.f32 %v647, 0.01
        %v672 = vmul.f32 %v652, 0.01
        %v673 = vmul.f32 %v655, 0.01
        %v674 = vmax.f32 %v596, %v658
        %v675 = vmax.f32 %v599, %v659
        %v676 = vmax.f32 %v604, %v660
        %v677 = vmax.f32 %v607, %v661
        %v678 = vmax.f32 %v612, %v662
        %v679 = vmax.f32 %v615, %v663
        %v680 = vmax.f32 %v620, %v664
        %v681 = vmax.f32 %v623, %v665
        %v682 = vmax.f32 %v628, %v666
        %v683 = vmax.f32 %v631, %v667
        %v684 = vmax.f32 %v636, %v668
        %v685 = vmax.f32 %v639, %v669
        %v686 = vmax.f32 %v644, %v670
        %v687 = vmax.f32 %v647, %v671
        %v688 = vmax.f32 %v652, %v672
        %v689 = vmax.f32 %v655, %v673
        %v690 = vld [vmem:[%s5] sm:$0x1]
        %v691 = vpack.c.bf16 %v675, %v674
        %v692 = vpack.c.bf16 %v677, %v676
        %v693 = vpack.c.bf16 %v679, %v678
        %v694 = vpack.c.bf16 %v681, %v680
        %v695 = vpack.c.bf16 %v683, %v682
        %v696 = vpack.c.bf16 %v685, %v684
        %v697 = vpack.c.bf16 %v687, %v686
        %v698 = vpack.c.bf16 %v689, %v688
        %s699 = sld [smem:[#allocation2]]
        %v700 = vstv %s699
        %v702 = vsel %vm536, %v690, 0
        %v705 = vsel %vm536, %v691, 0
        %v708 = vsel %vm536, %v692, 0
        %v711 = vsel %vm536, %v693, 0
        %v714 = vsel %vm536, %v694, 0
        %v717 = vsel %vm536, %v695, 0
        %v720 = vsel %vm536, %v696, 0
        %v723 = vsel %vm536, %v697, 0
        %v726 = vsel %vm536, %v698, 0
        %728 = vmatprep.subr.bf16.mxu0 0
        %729 = vmatpush1.bf16.xpose.msra.mxu0 %v705
        %730 = vmatprep.subr.bf16.mxu0 0
        %731 = vmatpush1.bf16.xpose.msra.mxu0 %v708
        %732 = vmatprep.subr.bf16.mxu0 0
        %733 = vmatpush1.bf16.xpose.msra.mxu0 %v711
        %734 = vmatprep.subr.bf16.mxu0 0
        %735 = vmatpush1.bf16.xpose.msra.mxu0 %v714
        %736 = vmatprep.subr.bf16.mxu0 0
        %737 = vmatpush1.bf16.xpose.msra.mxu0 %v717
        %738 = vmatprep.subr.bf16.mxu0 0
        %739 = vmatpush1.bf16.xpose.msra.mxu0 %v720
        %740 = vmatprep.subr.bf16.mxu0 0
        %741 = vmatpush1.bf16.xpose.msra.mxu0 %v723
        %742 = vmatprep.subr.bf16.mxu0 0
        %743 = vmatpush1.bf16.xpose.msra.mxu0 %v726
        %744 = vmatprep.subr.bf16.mxu0 0
        %745 = vmatpush1.bf16.xpose.msra.mxu0 0
        %746 = vmatprep.subr.bf16.mxu0 0
        %747 = vmatpush1.bf16.xpose.msra.mxu0 0
        %748 = vmatprep.subr.bf16.mxu0 0
        %749 = vmatpush1.bf16.xpose.msra.mxu0 0
        %750 = vmatprep.subr.bf16.mxu0 0
        %751 = vmatpush1.bf16.xpose.msra.mxu0 0
        %752 = vmatprep.subr.bf16.mxu0 0
        %753 = vmatpush1.bf16.xpose.msra.mxu0 0
        %754 = vmatprep.subr.bf16.mxu0 0
        %755 = vmatpush1.bf16.xpose.msra.mxu0 0
        %756 = vmatprep.subr.bf16.mxu0 0
        %757 = vmatpush1.bf16.xpose.msra.mxu0 0
        %758 = vmatprep.subr.bf16.mxu0 0
        %759 = vmatpush1.bf16.xpose.msra.mxu0 0
        %760 = vmatprep.mubr.bf16.mxu0 0
        %761 = vmatmul.mubr.bf16.gmra.mrb[0].mxu0 %v702
        %v762 = vpop.f32.mrb[0].mxu0
        %v763 = vadd.f32 %v700, %v762
        %v764 = vpop.f32.mrb[0].mxu0
        %v765 = vpop.f32.mrb[0].mxu0
        %v766 = vpop.f32.mrb[0].mxu0
        %767 = vdwg.mxu0
        %768 = vst [vmem:[%s272] sm:$0x1] %v763
        %s769 = sand.u32 %s182, 1
        %s770 = scalar_lea.sflag [#allocation4], %s769
        %s771 = sand.u32 %s182, 1
        %s772 = scalar_lea.vmem [#allocation3], %s771
        // Predicated region
        $region49: #{tpu_custom_call.1} parent=47 // pred_check
          %p773 = pneg %p192
        $region50: #{tpu_custom_call.1} parent=47 // pred_check_branch
          %775 = sbr.rel (%p773) target = $region52
        $region51: #{tpu_custom_call.1} parent=47 // pred_region
          %s777 = ssub.s32 16, 16
          %778 = vsyncadd %s770, %s777
          %s779 = smul.addr %s22, 16
          %s780 = scalar_lea.hbm %s7, %s779
          %s782 = sshll.u32 %s772, 4
          %s783 = int_to_ptr.vmem [resolvable:$true] %s782
          %785 = dma.vmem_to_hbm [thread:$0]  %s783, 16, %s780, %s770
        $region52: #{tpu_custom_call.1} parent=47 // pred_fallthru
          _
      $region48: #{tpu_custom_call.1} parent=5 // pred_fallthru
        _
      %p786 = scmp.le.s32.totalorder 2, %s17
      // Predicated region
      $region53: #{tpu_custom_call.1} parent=5 // pred_check
        %p787 = pneg %p786
      $region54: #{tpu_custom_call.1} parent=5 // pred_check_branch
        %789 = sbr.rel (%p787) target = $region56
      $region55: #{tpu_custom_call.1} parent=5 // pred_region
        %s790 = ssub.s32 %s17, 2
        // Predicated region
        $region57: #{tpu_custom_call.1} parent=55 // pred_check
          %p791 = pneg %p198
        $region58: #{tpu_custom_call.1} parent=55 // pred_check_branch
          %793 = sbr.rel (%p791) target = $region60
        $region59: #{tpu_custom_call.1} parent=55 // pred_region
          %s794 = sand.u32 %s183, 1
          %s795 = scalar_lea.sflag [#allocation4], %s794
          %s796 = sand.u32 %s183, 1
          %s797 = scalar_lea.vmem [#allocation3], %s796
          %798 = dma.done %s795, 16
        $region60: #{tpu_custom_call.1} parent=55 // pred_fallthru
          _
      $region56: #{tpu_custom_call.1} parent=5 // pred_fallthru
        _
    $region6: #{tpu_custom_call.1} parent=1 // loop_footer
      %s21 = sadd.s32 1, %s17
    $region7: #{tpu_custom_call.1} parent=1 // loop_footer_branch
      %16 = sbr.rel target = $region3
    $region8: #{tpu_custom_call.1} parent=1 // loop_exit
      _
    %799 = vsyncpa [#allocation4], 1
    %s800 = scalar_lea.sflag [#allocation4], 1
    %801 = vsyncpa %s800, 1

</llo_original>
